<compile_context>
chip_gen: v6e
topology: v6e:2x2x1
jax: 0.10.0
libtpu: 0.0.40
codegen_flags: <defaults>
</compile_context>

<pallas_src>
import math
import functools

import jax
import jax.numpy as jnp
from jax import lax
from jax.experimental import pallas as pl
from jax.experimental.pallas import tpu as pltpu


def _round_up(x, m):
    return ((x + m - 1) // m) * m


def _pick_chunk(T, max_chunk=256):
    """Time-chunk length.  max_chunk is a multiple of 16 so CT*BP (BP >= 8) is a
    multiple of 128 whenever more than one chunk is needed (lane-dense output
    blocks); the wrapper pads T up to a multiple of the chunk."""
    if T <= max_chunk:
        return T
    return max_chunk


def _gru_chunk_kernel(gi_ref, whh_ref, bhn_ref, wl_ref, bl_ref,
                      out_ref, hall_ref, hcarry_ref,
                      *, hidden_size, chunk_t, batch_pad):
    """One grid step == one chunk of CT GRU time steps (PyTorch gate order r,z,n)."""
    H = hidden_size
    CT = chunk_t
    BP = batch_pad

    # h0 = 0 for the first chunk; later chunks continue from the carry.
    @pl.when(pl.program_id(0) == 0)
    def _():
        hcarry_ref[...] = jnp.zeros_like(hcarry_ref)

    # Loop-invariant loads / broadcasts hoisted out of the recurrence.
    whh = whh_ref[...]                                   # (H, 3H) bf16, resident
    bhn = jnp.broadcast_to(bhn_ref[...], (BP, H))        # (BP, H) n-gate rec. bias

    def step(t, h):
        row = pl.multiple_of(t * BP, BP)                 # tile-aligned sublane offset
        gi_t = gi_ref[pl.ds(row, BP), :]                 # (BP, 3H) f32
        # Serial-critical-path matmul: bf16 operands, f32 accumulation.
        gh = jnp.dot(h.astype(jnp.bfloat16), whh,
                     preferred_element_type=jnp.float32)            # (BP, 3H)
        rz = jax.nn.sigmoid(gi_t[:, :2 * H] + gh[:, :2 * H])        # fused [r|z]
        r = rz[:, :H]
        z = rz[:, H:]
        n = jnp.tanh(gi_t[:, 2 * H:] + r * (gh[:, 2 * H:] + bhn))
        h_new = (1.0 - z) * n + z * h                    # f32 carried state
        hall_ref[pl.ds(row, BP), :] = h_new
        return h_new

    h_last = lax.fori_loop(0, CT, step, hcarry_ref[...], unroll=8)
    hcarry_ref[...] = h_last

    # Hoisted output head, lane-dense: (O, H) x (CT*BP, H)^T -> (O, CT*BP),
    # one full-width store per chunk.
    y = lax.dot_general(wl_ref[...], hall_ref[...].astype(jnp.bfloat16),
                        dimension_numbers=(((1,), (1,)), ((), ())),
                        preferred_element_type=jnp.float32)
    y = jnp.tanh(y + bl_ref[...])
    out_ref[...] = y.astype(out_ref.dtype)


def gru_model_forward(x, params, *, max_chunk=256):
    """x: (batch, seq, input_size) -> (batch, seq, output_size)."""
    w_ih_t, w_hh_t, b_ih, b_hh, w_lin, b_lin = params
    B, T, I = x.shape
    H = w_hh_t.shape[0]
    O = w_lin.shape[0]

    BP = _round_up(B, 8)                 # pad batch to a full sublane tile
    CT = _pick_chunk(T, max_chunk)
    T_pad = _round_up(T, CT)
    num_chunks = T_pad // CT

    # Fold the r/z recurrent biases into the input-projection bias; the n-gate
    # recurrent bias must stay inside the r* term, so keep it separate.
    b_gi = b_ih + jnp.concatenate(
        [b_hh[:, :2 * H], jnp.zeros((1, H), b_hh.dtype)], axis=1)
    b_hn = b_hh[:, 2 * H:]

    # Time-major (mirrors x.permute(1,0,2)), pad batch to BP and time to T_pad.
    x_tm = jnp.transpose(x, (1, 0, 2)).astype(jnp.float32)
    x_tm = jnp.pad(x_tm, ((0, T_pad - T), (0, BP - B), (0, 0)))

    # Hoisted, non-recurrent input projection: one XLA matmul produces the
    # lane-dense (T_pad*BP, 3H) gi slab the kernel streams chunk by chunk.
    gi = x_tm.reshape(T_pad * BP, I) @ w_ih_t + b_gi

    # bf16 MXU operands (accumulation stays f32 inside the kernel).
    whh_bf = w_hh_t.astype(jnp.bfloat16)
    wl_bf = w_lin.astype(jnp.bfloat16)

    kernel = functools.partial(_gru_chunk_kernel, hidden_size=H,
                               chunk_t=CT, batch_pad=BP)

    flops = 2 * T_pad * BP * (3 * H * H + H * O)
    transcendentals = T_pad * BP * (3 * H + O)
    bytes_accessed = (gi.size * 4 + O * T_pad * BP * 4
                      + whh_bf.size * 2 + wl_bf.size * 2
                      + b_hn.size * 4 + b_lin.size * 4)

    out2 = pl.pallas_call(
        kernel,
        out_shape=jax.ShapeDtypeStruct((O, T_pad * BP), x.dtype),
        grid_spec=pltpu.PrefetchScalarGridSpec(
            num_scalar_prefetch=0,
            grid=(num_chunks,),
            in_specs=[
                pl.BlockSpec((CT * BP, 3 * H), lambda c: (c, 0)),   # gi chunk
                pl.BlockSpec((H, 3 * H), lambda c: (0, 0)),         # W_hh^T (bf16)
                pl.BlockSpec((1, H), lambda c: (0, 0)),             # b_hh[n]
                pl.BlockSpec((O, H), lambda c: (0, 0)),             # W_lin (bf16)
                pl.BlockSpec((O, 1), lambda c: (0, 0)),             # b_lin
            ],
            out_specs=pl.BlockSpec((O, CT * BP), lambda c: (0, c)),
            scratch_shapes=[
                pltpu.VMEM((CT * BP, H), jnp.float32),   # hidden states of chunk
                pltpu.VMEM((BP, H), jnp.float32),        # h carry across chunks
            ],
        ),
        compiler_params=pltpu.CompilerParams(
            dimension_semantics=("arbitrary",),          # sequential recurrence
        ),
        cost_estimate=pl.CostEstimate(flops=flops,
                                      transcendentals=transcendentals,
                                      bytes_accessed=bytes_accessed),
    )(gi, whh_bf, b_hn, wl_bf, b_lin)

    # (O, T_pad*BP) columns are ordered t*BP + b -> (B, T, O), drop padding.
    out = out2.reshape(O, T_pad, BP)[:, :T, :B]
    return jnp.transpose(out, (2, 1, 0))


def init_params(key, input_size, hidden_size, output_size):
    """Deterministic init mirroring PyTorch's default U(-1/sqrt(H), 1/sqrt(H))."""
    ks = jax.random.split(key, 6)
    bound = 1.0 / math.sqrt(hidden_size)

    def u(k, shape):
        return jax.random.uniform(k, shape, jnp.float32, minval=-bound, maxval=bound)

    w_ih = u(ks[0], (3 * hidden_size, input_size))    # gate order [r, z, n]
    w_hh = u(ks[1], (3 * hidden_size, hidden_size))
    b_ih = u(ks[2], (3 * hidden_size,))
    b_hh = u(ks[3], (3 * hidden_size,))
    w_lin = u(ks[4], (output_size, hidden_size))
    b_lin = u(ks[5], (output_size,))

    # Pre-transpose GRU weights for the x @ W^T form; linear kept as (O, H);
    # biases as (1, 3H) / (O, 1).
    return (w_ih.T, w_hh.T, b_ih[None, :], b_hh[None, :], w_lin, b_lin[:, None])


def _reference_forward(x, params):
    """Pure-JAX f32 reference (torch.nn.GRU semantics) for the correctness check."""
    w_ih_t, w_hh_t, b_ih, b_hh, w_lin, b_lin = params
    H = w_hh_t.shape[0]
    x_tm = jnp.transpose(x, (1, 0, 2)).astype(jnp.float32)
    B = x_tm.shape[1]

    def step(h, x_t):
        gi = x_t @ w_ih_t + b_ih
        gh = h @ w_hh_t + b_hh
        r = jax.nn.sigmoid(gi[:, :H] + gh[:, :H])
        z = jax.nn.sigmoid(gi[:, H:2 * H] + gh[:, H:2 * H])
        n = jnp.tanh(gi[:, 2 * H:] + r * gh[:, 2 * H:])
        h_new = (1.0 - z) * n + z * h
        y = jnp.tanh(h_new @ w_lin.T + b_lin.T)
        return h_new, y

    h0 = jnp.zeros((B, H), jnp.float32)
    _, ys = lax.scan(step, h0, x_tm)
    return jnp.transpose(ys, (1, 0, 2)).astype(x.dtype)


if __name__ == "__main__":
    batch, seq, input_size, hidden_size, output_size = 2, 8, 1, 32, 1

    key = jax.random.PRNGKey(0)
    k_x, k_p = jax.random.split(key)
    x = jax.random.normal(k_x, (batch, seq, input_size), jnp.float32)
    params = init_params(k_p, input_size, hidden_size, output_size)

    out = jax.block_until_ready(gru_model_forward(x, params))
    ref = jax.block_until_ready(_reference_forward(x, params))

    assert out.shape == (batch, seq, output_size)
    # bf16 MXU operands (f32 accumulation / f32 carried state) vs. pure-f32
    # reference: tolerance reflects bf16 operand rounding only.
    assert jnp.allclose(out, ref, atol=2e-2, rtol=2e-2), \
        float(jnp.max(jnp.abs(out - ref)))

    print("KERNEL_OK")
</pallas_src>

<mosaic_0001>
module attributes {stable_mosaic.version = 11 : i64} {
  func.func @_gru_chunk_kernel(%arg0: i32, %arg1: memref<64x96xf32, #tpu.memory_space<vmem>>, %arg2: memref<32x96xbf16, #tpu.memory_space<vmem>>, %arg3: memref<1x32xf32, #tpu.memory_space<vmem>>, %arg4: memref<1x32xbf16, #tpu.memory_space<vmem>>, %arg5: memref<1x1xf32, #tpu.memory_space<vmem>>, %arg6: memref<1x64xf32, #tpu.memory_space<vmem>>, %arg7: memref<64x32xf32, #tpu.memory_space<vmem>>, %arg8: memref<8x32xf32, #tpu.memory_space<vmem>>) attributes {dimension_semantics = [#tpu.dimension_semantics<arbitrary>], iteration_bounds = array<i64: 1>, scalar_prefetch = 0 : i64, scratch_operands = 2 : i64, tpu.core_type = #tpu.core_type<tc>, window_params = [{transform_indices = @transform_0, window_bounds = array<i64: 64, 96>}, {pipeline_mode = #tpu.pipeline_mode<synchronous>, transform_indices = @transform_1, window_bounds = array<i64: 32, 96>}, {pipeline_mode = #tpu.pipeline_mode<synchronous>, transform_indices = @transform_2, window_bounds = array<i64: 1, 32>}, {pipeline_mode = #tpu.pipeline_mode<synchronous>, transform_indices = @transform_3, window_bounds = array<i64: 1, 32>}, {pipeline_mode = #tpu.pipeline_mode<synchronous>, transform_indices = @transform_4, window_bounds = array<i64: 1, 1>}, {transform_indices = @transform_5, window_bounds = array<i64: 1, 64>}]} {
    %c0_i32 = arith.constant 0 : i32
    %0 = arith.cmpi eq, %arg0, %c0_i32 : i32
    %1 = arith.extui %0 : i1 to i32
    %c0_i32_0 = arith.constant 0 : i32
    %2 = arith.cmpi ne, %1, %c0_i32_0 : i32
    scf.if %2 {
      %cst_65 = arith.constant 0.000000e+00 : f32
      %250 = vector.broadcast %cst_65 : f32 to vector<8x32xf32>
      %c0_66 = arith.constant 0 : index
      %c0_67 = arith.constant 0 : index
      %251 = vector.load %arg8[%c0_66, %c0_67] : memref<8x32xf32, #tpu.memory_space<vmem>>, vector<8x32xf32>
      tpu.vector_store %arg8[%c0_66, %c0_67], %250 {strides = array<i32>} : memref<8x32xf32, #tpu.memory_space<vmem>>, vector<8x32xf32>,
    } else {
    }
    %c0 = arith.constant 0 : index
    %c0_1 = arith.constant 0 : index
    %3 = vector.load %arg2[%c0, %c0_1] : memref<32x96xbf16, #tpu.memory_space<vmem>>, vector<32x96xbf16>
    %c0_2 = arith.constant 0 : index
    %c0_3 = arith.constant 0 : index
    %4 = vector.load %arg3[%c0_2, %c0_3] : memref<1x32xf32, #tpu.memory_space<vmem>>, vector<1x32xf32>
    %5 = vector.shape_cast %4 : vector<1x32xf32> to vector<1x32xf32>
    %6 = vector.broadcast %5 : vector<1x32xf32> to vector<8x32xf32>
    %c0_4 = arith.constant 0 : index
    %c0_5 = arith.constant 0 : index
    %7 = vector.load %arg8[%c0_4, %c0_5] : memref<8x32xf32, #tpu.memory_space<vmem>>, vector<8x32xf32>
    %c0_i32_6 = arith.constant 0 : i32
    %c8_i32 = arith.constant 8 : i32
    %8 = arith.muli %c0_i32_6, %c8_i32 : i32
    %9 = tpu.assume_multiple %8, 8 : i32
    %10 = arith.index_cast %9 : i32 to index
    %c0_7 = arith.constant 0 : index
    %11 = vector.load %arg1[%10, %c0_7] : memref<64x96xf32, #tpu.memory_space<vmem>>, vector<8x96xf32>
    %12 = arith.truncf %7 : vector<8x32xf32> to vector<8x32xbf16>
    %cst = arith.constant dense<0.000000e+00> : vector<8x96xf32>
    %13 = tpu.matmul %12, %3, %cst {dimension_numbers = #tpu.dot_dimension_numbers<[1], [0], [0], [1], [0, 0, 1, 1], [], []>} : vector<8x32xbf16>, vector<32x96xbf16>, vector<8x96xf32> -> vector<8x96xf32>
    %14 = vector.extract_strided_slice %11 {offsets = [0, 0], sizes = [8, 64], strides = [1, 1]} : vector<8x96xf32> to vector<8x64xf32>
    %15 = vector.extract_strided_slice %13 {offsets = [0, 0], sizes = [8, 64], strides = [1, 1]} : vector<8x96xf32> to vector<8x64xf32>
    %16 = arith.addf %14, %15 : vector<8x64xf32>
    %17 = arith.negf %16 : vector<8x64xf32>
    %18 = math.exp %17 : vector<8x64xf32>
    %cst_8 = arith.constant 1.000000e+00 : f32
    %19 = vector.broadcast %cst_8 : f32 to vector<8x64xf32>
    %20 = arith.addf %19, %18 : vector<8x64xf32>
    %21 = arith.divf %19, %20 : vector<8x64xf32>
    %22 = vector.extract_strided_slice %21 {offsets = [0, 0], sizes = [8, 32], strides = [1, 1]} : vector<8x64xf32> to vector<8x32xf32>
    %23 = vector.extract_strided_slice %21 {offsets = [0, 32], sizes = [8, 32], strides = [1, 1]} : vector<8x64xf32> to vector<8x32xf32>
    %24 = vector.extract_strided_slice %11 {offsets = [0, 64], sizes = [8, 32], strides = [1, 1]} : vector<8x96xf32> to vector<8x32xf32>
    %25 = vector.extract_strided_slice %13 {offsets = [0, 64], sizes = [8, 32], strides = [1, 1]} : vector<8x96xf32> to vector<8x32xf32>
    %26 = arith.addf %25, %6 : vector<8x32xf32>
    %27 = arith.mulf %22, %26 : vector<8x32xf32>
    %28 = arith.addf %24, %27 : vector<8x32xf32>
    %29 = math.tanh %28 : vector<8x32xf32>
    %cst_9 = arith.constant 1.000000e+00 : f32
    %30 = vector.broadcast %cst_9 : f32 to vector<8x32xf32>
    %31 = arith.subf %30, %23 : vector<8x32xf32>
    %32 = arith.mulf %31, %29 : vector<8x32xf32>
    %33 = arith.mulf %23, %7 : vector<8x32xf32>
    %34 = arith.addf %32, %33 : vector<8x32xf32>
    %35 = arith.index_cast %9 : i32 to index
    %c0_10 = arith.constant 0 : index
    %36 = vector.load %arg7[%35, %c0_10] : memref<64x32xf32, #tpu.memory_space<vmem>>, vector<8x32xf32>
    tpu.vector_store %arg7[%35, %c0_10], %34 {strides = array<i32>} : memref<64x32xf32, #tpu.memory_space<vmem>>, vector<8x32xf32>,
    %c1_i32 = arith.constant 1 : i32
    %c8_i32_11 = arith.constant 8 : i32
    %37 = arith.muli %c1_i32, %c8_i32_11 : i32
    %38 = tpu.assume_multiple %37, 8 : i32
    %39 = arith.index_cast %38 : i32 to index
    %c0_12 = arith.constant 0 : index
    %40 = vector.load %arg1[%39, %c0_12] : memref<64x96xf32, #tpu.memory_space<vmem>>, vector<8x96xf32>
    %41 = arith.truncf %34 : vector<8x32xf32> to vector<8x32xbf16>
    %cst_13 = arith.constant dense<0.000000e+00> : vector<8x96xf32>
    %42 = tpu.matmul %41, %3, %cst_13 {dimension_numbers = #tpu.dot_dimension_numbers<[1], [0], [0], [1], [0, 0, 1, 1], [], []>} : vector<8x32xbf16>, vector<32x96xbf16>, vector<8x96xf32> -> vector<8x96xf32>
    %43 = vector.extract_strided_slice %40 {offsets = [0, 0], sizes = [8, 64], strides = [1, 1]} : vector<8x96xf32> to vector<8x64xf32>
    %44 = vector.extract_strided_slice %42 {offsets = [0, 0], sizes = [8, 64], strides = [1, 1]} : vector<8x96xf32> to vector<8x64xf32>
    %45 = arith.addf %43, %44 : vector<8x64xf32>
    %46 = arith.negf %45 : vector<8x64xf32>
    %47 = math.exp %46 : vector<8x64xf32>
    %cst_14 = arith.constant 1.000000e+00 : f32
    %48 = vector.broadcast %cst_14 : f32 to vector<8x64xf32>
    %49 = arith.addf %48, %47 : vector<8x64xf32>
    %50 = arith.divf %48, %49 : vector<8x64xf32>
    %51 = vector.extract_strided_slice %50 {offsets = [0, 0], sizes = [8, 32], strides = [1, 1]} : vector<8x64xf32> to vector<8x32xf32>
    %52 = vector.extract_strided_slice %50 {offsets = [0, 32], sizes = [8, 32], strides = [1, 1]} : vector<8x64xf32> to vector<8x32xf32>
    %53 = vector.extract_strided_slice %40 {offsets = [0, 64], sizes = [8, 32], strides = [1, 1]} : vector<8x96xf32> to vector<8x32xf32>
    %54 = vector.extract_strided_slice %42 {offsets = [0, 64], sizes = [8, 32], strides = [1, 1]} : vector<8x96xf32> to vector<8x32xf32>
    %55 = arith.addf %54, %6 : vector<8x32xf32>
    %56 = arith.mulf %51, %55 : vector<8x32xf32>
    %57 = arith.addf %53, %56 : vector<8x32xf32>
    %58 = math.tanh %57 : vector<8x32xf32>
    %cst_15 = arith.constant 1.000000e+00 : f32
    %59 = vector.broadcast %cst_15 : f32 to vector<8x32xf32>
    %60 = arith.subf %59, %52 : vector<8x32xf32>
    %61 = arith.mulf %60, %58 : vector<8x32xf32>
    %62 = arith.mulf %52, %34 : vector<8x32xf32>
    %63 = arith.addf %61, %62 : vector<8x32xf32>
    %64 = arith.index_cast %38 : i32 to index
    %c0_16 = arith.constant 0 : index
    %65 = vector.load %arg7[%64, %c0_16] : memref<64x32xf32, #tpu.memory_space<vmem>>, vector<8x32xf32>
    tpu.vector_store %arg7[%64, %c0_16], %63 {strides = array<i32>} : memref<64x32xf32, #tpu.memory_space<vmem>>, vector<8x32xf32>,
    %c2_i32 = arith.constant 2 : i32
    %c8_i32_17 = arith.constant 8 : i32
    %66 = arith.muli %c2_i32, %c8_i32_17 : i32
    %67 = tpu.assume_multiple %66, 8 : i32
    %68 = arith.index_cast %67 : i32 to index
    %c0_18 = arith.constant 0 : index
    %69 = vector.load %arg1[%68, %c0_18] : memref<64x96xf32, #tpu.memory_space<vmem>>, vector<8x96xf32>
    %70 = arith.truncf %63 : vector<8x32xf32> to vector<8x32xbf16>
    %cst_19 = arith.constant dense<0.000000e+00> : vector<8x96xf32>
    %71 = tpu.matmul %70, %3, %cst_19 {dimension_numbers = #tpu.dot_dimension_numbers<[1], [0], [0], [1], [0, 0, 1, 1], [], []>} : vector<8x32xbf16>, vector<32x96xbf16>, vector<8x96xf32> -> vector<8x96xf32>
    %72 = vector.extract_strided_slice %69 {offsets = [0, 0], sizes = [8, 64], strides = [1, 1]} : vector<8x96xf32> to vector<8x64xf32>
    %73 = vector.extract_strided_slice %71 {offsets = [0, 0], sizes = [8, 64], strides = [1, 1]} : vector<8x96xf32> to vector<8x64xf32>
    %74 = arith.addf %72, %73 : vector<8x64xf32>
    %75 = arith.negf %74 : vector<8x64xf32>
    %76 = math.exp %75 : vector<8x64xf32>
    %cst_20 = arith.constant 1.000000e+00 : f32
    %77 = vector.broadcast %cst_20 : f32 to vector<8x64xf32>
    %78 = arith.addf %77, %76 : vector<8x64xf32>
    %79 = arith.divf %77, %78 : vector<8x64xf32>
    %80 = vector.extract_strided_slice %79 {offsets = [0, 0], sizes = [8, 32], strides = [1, 1]} : vector<8x64xf32> to vector<8x32xf32>
    %81 = vector.extract_strided_slice %79 {offsets = [0, 32], sizes = [8, 32], strides = [1, 1]} : vector<8x64xf32> to vector<8x32xf32>
    %82 = vector.extract_strided_slice %69 {offsets = [0, 64], sizes = [8, 32], strides = [1, 1]} : vector<8x96xf32> to vector<8x32xf32>
    %83 = vector.extract_strided_slice %71 {offsets = [0, 64], sizes = [8, 32], strides = [1, 1]} : vector<8x96xf32> to vector<8x32xf32>
    %84 = arith.addf %83, %6 : vector<8x32xf32>
    %85 = arith.mulf %80, %84 : vector<8x32xf32>
    %86 = arith.addf %82, %85 : vector<8x32xf32>
    %87 = math.tanh %86 : vector<8x32xf32>
    %cst_21 = arith.constant 1.000000e+00 : f32
    %88 = vector.broadcast %cst_21 : f32 to vector<8x32xf32>
    %89 = arith.subf %88, %81 : vector<8x32xf32>
    %90 = arith.mulf %89, %87 : vector<8x32xf32>
    %91 = arith.mulf %81, %63 : vector<8x32xf32>
    %92 = arith.addf %90, %91 : vector<8x32xf32>
    %93 = arith.index_cast %67 : i32 to index
    %c0_22 = arith.constant 0 : index
    %94 = vector.load %arg7[%93, %c0_22] : memref<64x32xf32, #tpu.memory_space<vmem>>, vector<8x32xf32>
    tpu.vector_store %arg7[%93, %c0_22], %92 {strides = array<i32>} : memref<64x32xf32, #tpu.memory_space<vmem>>, vector<8x32xf32>,
    %c3_i32 = arith.constant 3 : i32
    %c8_i32_23 = arith.constant 8 : i32
    %95 = arith.muli %c3_i32, %c8_i32_23 : i32
    %96 = tpu.assume_multiple %95, 8 : i32
    %97 = arith.index_cast %96 : i32 to index
    %c0_24 = arith.constant 0 : index
    %98 = vector.load %arg1[%97, %c0_24] : memref<64x96xf32, #tpu.memory_space<vmem>>, vector<8x96xf32>
    %99 = arith.truncf %92 : vector<8x32xf32> to vector<8x32xbf16>
    %cst_25 = arith.constant dense<0.000000e+00> : vector<8x96xf32>
    %100 = tpu.matmul %99, %3, %cst_25 {dimension_numbers = #tpu.dot_dimension_numbers<[1], [0], [0], [1], [0, 0, 1, 1], [], []>} : vector<8x32xbf16>, vector<32x96xbf16>, vector<8x96xf32> -> vector<8x96xf32>
    %101 = vector.extract_strided_slice %98 {offsets = [0, 0], sizes = [8, 64], strides = [1, 1]} : vector<8x96xf32> to vector<8x64xf32>
    %102 = vector.extract_strided_slice %100 {offsets = [0, 0], sizes = [8, 64], strides = [1, 1]} : vector<8x96xf32> to vector<8x64xf32>
    %103 = arith.addf %101, %102 : vector<8x64xf32>
    %104 = arith.negf %103 : vector<8x64xf32>
    %105 = math.exp %104 : vector<8x64xf32>
    %cst_26 = arith.constant 1.000000e+00 : f32
    %106 = vector.broadcast %cst_26 : f32 to vector<8x64xf32>
    %107 = arith.addf %106, %105 : vector<8x64xf32>
    %108 = arith.divf %106, %107 : vector<8x64xf32>
    %109 = vector.extract_strided_slice %108 {offsets = [0, 0], sizes = [8, 32], strides = [1, 1]} : vector<8x64xf32> to vector<8x32xf32>
    %110 = vector.extract_strided_slice %108 {offsets = [0, 32], sizes = [8, 32], strides = [1, 1]} : vector<8x64xf32> to vector<8x32xf32>
    %111 = vector.extract_strided_slice %98 {offsets = [0, 64], sizes = [8, 32], strides = [1, 1]} : vector<8x96xf32> to vector<8x32xf32>
    %112 = vector.extract_strided_slice %100 {offsets = [0, 64], sizes = [8, 32], strides = [1, 1]} : vector<8x96xf32> to vector<8x32xf32>
    %113 = arith.addf %112, %6 : vector<8x32xf32>
    %114 = arith.mulf %109, %113 : vector<8x32xf32>
    %115 = arith.addf %111, %114 : vector<8x32xf32>
    %116 = math.tanh %115 : vector<8x32xf32>
    %cst_27 = arith.constant 1.000000e+00 : f32
    %117 = vector.broadcast %cst_27 : f32 to vector<8x32xf32>
    %118 = arith.subf %117, %110 : vector<8x32xf32>
    %119 = arith.mulf %118, %116 : vector<8x32xf32>
    %120 = arith.mulf %110, %92 : vector<8x32xf32>
    %121 = arith.addf %119, %120 : vector<8x32xf32>
    %122 = arith.index_cast %96 : i32 to index
    %c0_28 = arith.constant 0 : index
    %123 = vector.load %arg7[%122, %c0_28] : memref<64x32xf32, #tpu.memory_space<vmem>>, vector<8x32xf32>
    tpu.vector_store %arg7[%122, %c0_28], %121 {strides = array<i32>} : memref<64x32xf32, #tpu.memory_space<vmem>>, vector<8x32xf32>,
    %c4_i32 = arith.constant 4 : i32
    %c8_i32_29 = arith.constant 8 : i32
    %124 = arith.muli %c4_i32, %c8_i32_29 : i32
    %125 = tpu.assume_multiple %124, 8 : i32
    %126 = arith.index_cast %125 : i32 to index
    %c0_30 = arith.constant 0 : index
    %127 = vector.load %arg1[%126, %c0_30] : memref<64x96xf32, #tpu.memory_space<vmem>>, vector<8x96xf32>
    %128 = arith.truncf %121 : vector<8x32xf32> to vector<8x32xbf16>
    %cst_31 = arith.constant dense<0.000000e+00> : vector<8x96xf32>
    %129 = tpu.matmul %128, %3, %cst_31 {dimension_numbers = #tpu.dot_dimension_numbers<[1], [0], [0], [1], [0, 0, 1, 1], [], []>} : vector<8x32xbf16>, vector<32x96xbf16>, vector<8x96xf32> -> vector<8x96xf32>
    %130 = vector.extract_strided_slice %127 {offsets = [0, 0], sizes = [8, 64], strides = [1, 1]} : vector<8x96xf32> to vector<8x64xf32>
    %131 = vector.extract_strided_slice %129 {offsets = [0, 0], sizes = [8, 64], strides = [1, 1]} : vector<8x96xf32> to vector<8x64xf32>
    %132 = arith.addf %130, %131 : vector<8x64xf32>
    %133 = arith.negf %132 : vector<8x64xf32>
    %134 = math.exp %133 : vector<8x64xf32>
    %cst_32 = arith.constant 1.000000e+00 : f32
    %135 = vector.broadcast %cst_32 : f32 to vector<8x64xf32>
    %136 = arith.addf %135, %134 : vector<8x64xf32>
    %137 = arith.divf %135, %136 : vector<8x64xf32>
    %138 = vector.extract_strided_slice %137 {offsets = [0, 0], sizes = [8, 32], strides = [1, 1]} : vector<8x64xf32> to vector<8x32xf32>
    %139 = vector.extract_strided_slice %137 {offsets = [0, 32], sizes = [8, 32], strides = [1, 1]} : vector<8x64xf32> to vector<8x32xf32>
    %140 = vector.extract_strided_slice %127 {offsets = [0, 64], sizes = [8, 32], strides = [1, 1]} : vector<8x96xf32> to vector<8x32xf32>
    %141 = vector.extract_strided_slice %129 {offsets = [0, 64], sizes = [8, 32], strides = [1, 1]} : vector<8x96xf32> to vector<8x32xf32>
    %142 = arith.addf %141, %6 : vector<8x32xf32>
    %143 = arith.mulf %138, %142 : vector<8x32xf32>
    %144 = arith.addf %140, %143 : vector<8x32xf32>
    %145 = math.tanh %144 : vector<8x32xf32>
    %cst_33 = arith.constant 1.000000e+00 : f32
    %146 = vector.broadcast %cst_33 : f32 to vector<8x32xf32>
    %147 = arith.subf %146, %139 : vector<8x32xf32>
    %148 = arith.mulf %147, %145 : vector<8x32xf32>
    %149 = arith.mulf %139, %121 : vector<8x32xf32>
    %150 = arith.addf %148, %149 : vector<8x32xf32>
    %151 = arith.index_cast %125 : i32 to index
    %c0_34 = arith.constant 0 : index
    %152 = vector.load %arg7[%151, %c0_34] : memref<64x32xf32, #tpu.memory_space<vmem>>, vector<8x32xf32>
    tpu.vector_store %arg7[%151, %c0_34], %150 {strides = array<i32>} : memref<64x32xf32, #tpu.memory_space<vmem>>, vector<8x32xf32>,
    %c5_i32 = arith.constant 5 : i32
    %c8_i32_35 = arith.constant 8 : i32
    %153 = arith.muli %c5_i32, %c8_i32_35 : i32
    %154 = tpu.assume_multiple %153, 8 : i32
    %155 = arith.index_cast %154 : i32 to index
    %c0_36 = arith.constant 0 : index
    %156 = vector.load %arg1[%155, %c0_36] : memref<64x96xf32, #tpu.memory_space<vmem>>, vector<8x96xf32>
    %157 = arith.truncf %150 : vector<8x32xf32> to vector<8x32xbf16>
    %cst_37 = arith.constant dense<0.000000e+00> : vector<8x96xf32>
    %158 = tpu.matmul %157, %3, %cst_37 {dimension_numbers = #tpu.dot_dimension_numbers<[1], [0], [0], [1], [0, 0, 1, 1], [], []>} : vector<8x32xbf16>, vector<32x96xbf16>, vector<8x96xf32> -> vector<8x96xf32>
    %159 = vector.extract_strided_slice %156 {offsets = [0, 0], sizes = [8, 64], strides = [1, 1]} : vector<8x96xf32> to vector<8x64xf32>
    %160 = vector.extract_strided_slice %158 {offsets = [0, 0], sizes = [8, 64], strides = [1, 1]} : vector<8x96xf32> to vector<8x64xf32>
    %161 = arith.addf %159, %160 : vector<8x64xf32>
    %162 = arith.negf %161 : vector<8x64xf32>
    %163 = math.exp %162 : vector<8x64xf32>
    %cst_38 = arith.constant 1.000000e+00 : f32
    %164 = vector.broadcast %cst_38 : f32 to vector<8x64xf32>
    %165 = arith.addf %164, %163 : vector<8x64xf32>
    %166 = arith.divf %164, %165 : vector<8x64xf32>
    %167 = vector.extract_strided_slice %166 {offsets = [0, 0], sizes = [8, 32], strides = [1, 1]} : vector<8x64xf32> to vector<8x32xf32>
    %168 = vector.extract_strided_slice %166 {offsets = [0, 32], sizes = [8, 32], strides = [1, 1]} : vector<8x64xf32> to vector<8x32xf32>
    %169 = vector.extract_strided_slice %156 {offsets = [0, 64], sizes = [8, 32], strides = [1, 1]} : vector<8x96xf32> to vector<8x32xf32>
    %170 = vector.extract_strided_slice %158 {offsets = [0, 64], sizes = [8, 32], strides = [1, 1]} : vector<8x96xf32> to vector<8x32xf32>
    %171 = arith.addf %170, %6 : vector<8x32xf32>
    %172 = arith.mulf %167, %171 : vector<8x32xf32>
    %173 = arith.addf %169, %172 : vector<8x32xf32>
    %174 = math.tanh %173 : vector<8x32xf32>
    %cst_39 = arith.constant 1.000000e+00 : f32
    %175 = vector.broadcast %cst_39 : f32 to vector<8x32xf32>
    %176 = arith.subf %175, %168 : vector<8x32xf32>
    %177 = arith.mulf %176, %174 : vector<8x32xf32>
    %178 = arith.mulf %168, %150 : vector<8x32xf32>
    %179 = arith.addf %177, %178 : vector<8x32xf32>
    %180 = arith.index_cast %154 : i32 to index
    %c0_40 = arith.constant 0 : index
    %181 = vector.load %arg7[%180, %c0_40] : memref<64x32xf32, #tpu.memory_space<vmem>>, vector<8x32xf32>
    tpu.vector_store %arg7[%180, %c0_40], %179 {strides = array<i32>} : memref<64x32xf32, #tpu.memory_space<vmem>>, vector<8x32xf32>,
    %c6_i32 = arith.constant 6 : i32
    %c8_i32_41 = arith.constant 8 : i32
    %182 = arith.muli %c6_i32, %c8_i32_41 : i32
    %183 = tpu.assume_multiple %182, 8 : i32
    %184 = arith.index_cast %183 : i32 to index
    %c0_42 = arith.constant 0 : index
    %185 = vector.load %arg1[%184, %c0_42] : memref<64x96xf32, #tpu.memory_space<vmem>>, vector<8x96xf32>
    %186 = arith.truncf %179 : vector<8x32xf32> to vector<8x32xbf16>
    %cst_43 = arith.constant dense<0.000000e+00> : vector<8x96xf32>
    %187 = tpu.matmul %186, %3, %cst_43 {dimension_numbers = #tpu.dot_dimension_numbers<[1], [0], [0], [1], [0, 0, 1, 1], [], []>} : vector<8x32xbf16>, vector<32x96xbf16>, vector<8x96xf32> -> vector<8x96xf32>
    %188 = vector.extract_strided_slice %185 {offsets = [0, 0], sizes = [8, 64], strides = [1, 1]} : vector<8x96xf32> to vector<8x64xf32>
    %189 = vector.extract_strided_slice %187 {offsets = [0, 0], sizes = [8, 64], strides = [1, 1]} : vector<8x96xf32> to vector<8x64xf32>
    %190 = arith.addf %188, %189 : vector<8x64xf32>
    %191 = arith.negf %190 : vector<8x64xf32>
    %192 = math.exp %191 : vector<8x64xf32>
    %cst_44 = arith.constant 1.000000e+00 : f32
    %193 = vector.broadcast %cst_44 : f32 to vector<8x64xf32>
    %194 = arith.addf %193, %192 : vector<8x64xf32>
    %195 = arith.divf %193, %194 : vector<8x64xf32>
    %196 = vector.extract_strided_slice %195 {offsets = [0, 0], sizes = [8, 32], strides = [1, 1]} : vector<8x64xf32> to vector<8x32xf32>
    %197 = vector.extract_strided_slice %195 {offsets = [0, 32], sizes = [8, 32], strides = [1, 1]} : vector<8x64xf32> to vector<8x32xf32>
    %198 = vector.extract_strided_slice %185 {offsets = [0, 64], sizes = [8, 32], strides = [1, 1]} : vector<8x96xf32> to vector<8x32xf32>
    %199 = vector.extract_strided_slice %187 {offsets = [0, 64], sizes = [8, 32], strides = [1, 1]} : vector<8x96xf32> to vector<8x32xf32>
    %200 = arith.addf %199, %6 : vector<8x32xf32>
    %201 = arith.mulf %196, %200 : vector<8x32xf32>
    %202 = arith.addf %198, %201 : vector<8x32xf32>
    %203 = math.tanh %202 : vector<8x32xf32>
    %cst_45 = arith.constant 1.000000e+00 : f32
    %204 = vector.broadcast %cst_45 : f32 to vector<8x32xf32>
    %205 = arith.subf %204, %197 : vector<8x32xf32>
    %206 = arith.mulf %205, %203 : vector<8x32xf32>
    %207 = arith.mulf %197, %179 : vector<8x32xf32>
    %208 = arith.addf %206, %207 : vector<8x32xf32>
    %209 = arith.index_cast %183 : i32 to index
    %c0_46 = arith.constant 0 : index
    %210 = vector.load %arg7[%209, %c0_46] : memref<64x32xf32, #tpu.memory_space<vmem>>, vector<8x32xf32>
    tpu.vector_store %arg7[%209, %c0_46], %208 {strides = array<i32>} : memref<64x32xf32, #tpu.memory_space<vmem>>, vector<8x32xf32>,
    %c7_i32 = arith.constant 7 : i32
    %c8_i32_47 = arith.constant 8 : i32
    %211 = arith.muli %c7_i32, %c8_i32_47 : i32
    %212 = tpu.assume_multiple %211, 8 : i32
    %213 = arith.index_cast %212 : i32 to index
    %c0_48 = arith.constant 0 : index
    %214 = vector.load %arg1[%213, %c0_48] : memref<64x96xf32, #tpu.memory_space<vmem>>, vector<8x96xf32>
    %215 = arith.truncf %208 : vector<8x32xf32> to vector<8x32xbf16>
    %cst_49 = arith.constant dense<0.000000e+00> : vector<8x96xf32>
    %216 = tpu.matmul %215, %3, %cst_49 {dimension_numbers = #tpu.dot_dimension_numbers<[1], [0], [0], [1], [0, 0, 1, 1], [], []>} : vector<8x32xbf16>, vector<32x96xbf16>, vector<8x96xf32> -> vector<8x96xf32>
    %217 = vector.extract_strided_slice %214 {offsets = [0, 0], sizes = [8, 64], strides = [1, 1]} : vector<8x96xf32> to vector<8x64xf32>
    %218 = vector.extract_strided_slice %216 {offsets = [0, 0], sizes = [8, 64], strides = [1, 1]} : vector<8x96xf32> to vector<8x64xf32>
    %219 = arith.addf %217, %218 : vector<8x64xf32>
    %220 = arith.negf %219 : vector<8x64xf32>
    %221 = math.exp %220 : vector<8x64xf32>
    %cst_50 = arith.constant 1.000000e+00 : f32
    %222 = vector.broadcast %cst_50 : f32 to vector<8x64xf32>
    %223 = arith.addf %222, %221 : vector<8x64xf32>
    %224 = arith.divf %222, %223 : vector<8x64xf32>
    %225 = vector.extract_strided_slice %224 {offsets = [0, 0], sizes = [8, 32], strides = [1, 1]} : vector<8x64xf32> to vector<8x32xf32>
    %226 = vector.extract_strided_slice %224 {offsets = [0, 32], sizes = [8, 32], strides = [1, 1]} : vector<8x64xf32> to vector<8x32xf32>
    %227 = vector.extract_strided_slice %214 {offsets = [0, 64], sizes = [8, 32], strides = [1, 1]} : vector<8x96xf32> to vector<8x32xf32>
    %228 = vector.extract_strided_slice %216 {offsets = [0, 64], sizes = [8, 32], strides = [1, 1]} : vector<8x96xf32> to vector<8x32xf32>
    %229 = arith.addf %228, %6 : vector<8x32xf32>
    %230 = arith.mulf %225, %229 : vector<8x32xf32>
    %231 = arith.addf %227, %230 : vector<8x32xf32>
    %232 = math.tanh %231 : vector<8x32xf32>
    %cst_51 = arith.constant 1.000000e+00 : f32
    %233 = vector.broadcast %cst_51 : f32 to vector<8x32xf32>
    %234 = arith.subf %233, %226 : vector<8x32xf32>
    %235 = arith.mulf %234, %232 : vector<8x32xf32>
    %236 = arith.mulf %226, %208 : vector<8x32xf32>
    %237 = arith.addf %235, %236 : vector<8x32xf32>
    %238 = arith.index_cast %212 : i32 to index
    %c0_52 = arith.constant 0 : index
    %239 = vector.load %arg7[%238, %c0_52] : memref<64x32xf32, #tpu.memory_space<vmem>>, vector<8x32xf32>
    tpu.vector_store %arg7[%238, %c0_52], %237 {strides = array<i32>} : memref<64x32xf32, #tpu.memory_space<vmem>>, vector<8x32xf32>,
    %c8_i32_53 = arith.constant 8 : i32
    %c0_54 = arith.constant 0 : index
    %c0_55 = arith.constant 0 : index
    %240 = vector.load %arg8[%c0_54, %c0_55] : memref<8x32xf32, #tpu.memory_space<vmem>>, vector<8x32xf32>
    tpu.vector_store %arg8[%c0_54, %c0_55], %237 {strides = array<i32>} : memref<8x32xf32, #tpu.memory_space<vmem>>, vector<8x32xf32>,
    %c0_56 = arith.constant 0 : index
    %c0_57 = arith.constant 0 : index
    %241 = vector.load %arg4[%c0_56, %c0_57] : memref<1x32xbf16, #tpu.memory_space<vmem>>, vector<1x32xbf16>
    %c0_58 = arith.constant 0 : index
    %c0_59 = arith.constant 0 : index
    %242 = vector.load %arg7[%c0_58, %c0_59] : memref<64x32xf32, #tpu.memory_space<vmem>>, vector<64x32xf32>
    %243 = arith.truncf %242 : vector<64x32xf32> to vector<64x32xbf16>
    %cst_60 = arith.constant dense<0.000000e+00> : vector<1x64xf32>
    %244 = tpu.matmul %241, %243, %cst_60 {dimension_numbers = #tpu.dot_dimension_numbers<[1], [1], [0], [0], [0, 0, 1, 0], [], []>} : vector<1x32xbf16>, vector<64x32xbf16>, vector<1x64xf32> -> vector<1x64xf32>
    %c0_61 = arith.constant 0 : index
    %c0_62 = arith.constant 0 : index
    %245 = vector.load %arg5[%c0_61, %c0_62] : memref<1x1xf32, #tpu.memory_space<vmem>>, vector<1x1xf32>
    %246 = vector.broadcast %245 : vector<1x1xf32> to vector<1x64xf32>
    %247 = arith.addf %244, %246 : vector<1x64xf32>
    %248 = math.tanh %247 : vector<1x64xf32>
    %c0_63 = arith.constant 0 : index
    %c0_64 = arith.constant 0 : index
    %249 = vector.load %arg6[%c0_63, %c0_64] : memref<1x64xf32, #tpu.memory_space<vmem>>, vector<1x64xf32>
    tpu.vector_store %arg6[%c0_63, %c0_64], %248 {strides = array<i32>} : memref<1x64xf32, #tpu.memory_space<vmem>>, vector<1x64xf32>,
    return
  }
  func.func @transform_0(%arg0: i32) -> (i32, i32) {
    %c0_i32 = arith.constant 0 : i32
    %c0_i32_0 = arith.constant 0 : i32
    return %arg0, %c0_i32 : i32, i32
  }
  func.func @transform_1(%arg0: i32) -> (i32, i32) {
    %c0_i32 = arith.constant 0 : i32
    %c0_i32_0 = arith.constant 0 : i32
    %c0_i32_1 = arith.constant 0 : i32
    return %c0_i32, %c0_i32_0 : i32, i32
  }
  func.func @transform_2(%arg0: i32) -> (i32, i32) {
    %c0_i32 = arith.constant 0 : i32
    %c0_i32_0 = arith.constant 0 : i32
    %c0_i32_1 = arith.constant 0 : i32
    return %c0_i32, %c0_i32_0 : i32, i32
  }
  func.func @transform_3(%arg0: i32) -> (i32, i32) {
    %c0_i32 = arith.constant 0 : i32
    %c0_i32_0 = arith.constant 0 : i32
    %c0_i32_1 = arith.constant 0 : i32
    return %c0_i32, %c0_i32_0 : i32, i32
  }
  func.func @transform_4(%arg0: i32) -> (i32, i32) {
    %c0_i32 = arith.constant 0 : i32
    %c0_i32_0 = arith.constant 0 : i32
    %c0_i32_1 = arith.constant 0 : i32
    return %c0_i32, %c0_i32_0 : i32, i32
  }
  func.func @transform_5(%arg0: i32) -> (i32, i32) {
    %c0_i32 = arith.constant 0 : i32
    %c0_i32_0 = arith.constant 0 : i32
    return %c0_i32, %arg0 : i32, i32
  }
}

</mosaic_0001>

<llo_original>
// kernel: tpu_custom_call.1
$region0: #{tpu_custom_call.1}
  #allocation0 [shape = 'u32[]', space=smem, size = 0x4, offset = 0x4, fixed_abs, tag = 'smem constant byte address 0x4 - core index']
  #allocation1 [shape = 'u32[144,128]{1,0:T(1,128)}', space=vmem, size = 0x12000, scoped, tag = 'internal scratch']
  #allocation2 [shape = 'f32[64,32]{1,0:T(8,128)}', space=vmem, size = 0x8000, scoped, tag = 'scratch operand']
  #allocation3 [shape = 'f32[8,32]{1,0:T(8,128)}', space=vmem, size = 0x1000, scoped, tag = 'scratch operand']
  #allocation4 [shape = 'f32[1,1]{1,0:T(1,128)S(1)}', space=vmem, size = 0x200, scoped, tag = 'scoped memory for tpu_custom_call.1']
  %s0 = inlined_call_operand.hbm [shape: f32[64,96], index: 0, kind: input, shape index: {}]
  %s1 = inlined_call_operand.hbm [shape: bf16[32,96], index: 1, kind: input, shape index: {}]
  %s2 = inlined_call_operand.vmem [shape: f32[1,32], index: 2, kind: input, shape index: {}]
  %s3 = inlined_call_operand.vmem [shape: bf16[1,32], index: 3, kind: input, shape index: {}]
  %s4 = inlined_call_operand.<no memory space> [shape: f32[1,1], index: 4, kind: input, shape index: {}]
  %s5 = inlined_call_operand.hbm [shape: f32[1,64], index: 5, kind: output, shape index: {}]
  %s6 = sld [smem:[#allocation0]]
  $region42: #{tpu_custom_call.1} parent=0
    _
  %s8 = ssub.s32 1, %s6
  %s9 = scalar_select 0, %s8, %s6
  %v10 = vstv %s4
  %11 = vst [vmem:[#allocation4] sm:$0x1] %v10
  $region1: #{tpu_custom_call.1} parent=0
    #allocation5 [shape = 'u8[32768]{0}', space=vmem, size = 0x8000, scoped, tag = 'input window, operand 0, single buffered']
    #allocation6 [shape = 's32[1]{0}', space=sflag, size = 0x4, scoped, tag = 'scoped memory for tpu_custom_call.1']
    #allocation7 [shape = 's32[1]{0}', space=sflag, size = 0x4, scoped, tag = 'scoped memory for tpu_custom_call.1']
    #allocation8 [shape = 'u8[8192]{0}', space=vmem, size = 0x2000, scoped, tag = 'input window, operand 1, single buffered']
    #allocation9 [shape = 's32[1]{0}', space=sflag, size = 0x4, scoped, tag = 'scoped memory for tpu_custom_call.1']
    #allocation10 [shape = 'u8[512]{0}', space=vmem, size = 0x400, scoped, tag = 'output window, operand 0, single buffered']
    %12 = vsyncpa [#allocation6], 0
    %13 = vsyncpa [#allocation9], 0
    %14 = vsyncpa [#allocation7], 0
    // Predicated region
    $region2: #{tpu_custom_call.1} parent=1 // pred_check
      _
    $region3: #{tpu_custom_call.1} parent=1 // pred_check_branch
      %16 = sbr.rel (0) target = $region5
    $region4: #{tpu_custom_call.1} parent=1 // pred_region
      %s18 = ssub.s32 1024, 1024
      %19 = vsyncadd [#allocation6], %s18
      %s20 = sshll.u32 [#allocation5], 4
      %s21 = int_to_ptr.vmem [resolvable:$true] %s20
      %26 = dma.hbm_to_vmem [thread:$0]  %s0, 1024, %s21, [#allocation6], 128, 128, 8
    $region5: #{tpu_custom_call.1} parent=1 // pred_fallthru
      _
    // Predicated region
    $region6: #{tpu_custom_call.1} parent=1 // pred_check
      _
    $region7: #{tpu_custom_call.1} parent=1 // pred_check_branch
      %28 = sbr.rel (0) target = $region9
    $region8: #{tpu_custom_call.1} parent=1 // pred_region
      %s30 = ssub.s32 256, 256
      %31 = vsyncadd [#allocation9], %s30
      %s32 = sshll.u32 [#allocation8], 4
      %s33 = int_to_ptr.vmem [resolvable:$true] %s32
      %38 = dma.hbm_to_vmem [thread:$0]  %s1, 256, %s33, [#allocation9], 64, 64, 4
    $region9: #{tpu_custom_call.1} parent=1 // pred_fallthru
      _
    // Predicated region
    $region10: #{tpu_custom_call.1} parent=1 // pred_check
      _
    $region11: #{tpu_custom_call.1} parent=1 // pred_check_branch
      %40 = sbr.rel (0) target = $region13
    $region12: #{tpu_custom_call.1} parent=1 // pred_region
      _
    $region13: #{tpu_custom_call.1} parent=1 // pred_fallthru
      _
    // Predicated region
    $region14: #{tpu_custom_call.1} parent=1 // pred_check
      _
    $region15: #{tpu_custom_call.1} parent=1 // pred_check_branch
      %42 = sbr.rel (0) target = $region17
    $region16: #{tpu_custom_call.1} parent=1 // pred_region
      _
    $region17: #{tpu_custom_call.1} parent=1 // pred_fallthru
      _
    // Predicated region
    $region18: #{tpu_custom_call.1} parent=1 // pred_check
      _
    $region19: #{tpu_custom_call.1} parent=1 // pred_check_branch
      %44 = sbr.rel (0) target = $region21
    $region20: #{tpu_custom_call.1} parent=1 // pred_region
      _
    $region21: #{tpu_custom_call.1} parent=1 // pred_fallthru
      _
    // Predicated region
    $region22: #{tpu_custom_call.1} parent=1 // pred_check
      _
    $region23: #{tpu_custom_call.1} parent=1 // pred_check_branch
      %46 = sbr.rel (0) target = $region25
    $region24: #{tpu_custom_call.1} parent=1 // pred_region
      %47 = dma.done [#allocation6], 1024
    $region25: #{tpu_custom_call.1} parent=1 // pred_fallthru
      _
    // Predicated region
    $region26: #{tpu_custom_call.1} parent=1 // pred_check
      _
    $region27: #{tpu_custom_call.1} parent=1 // pred_check_branch
      %49 = sbr.rel (0) target = $region29
    $region28: #{tpu_custom_call.1} parent=1 // pred_region
      %50 = dma.done [#allocation9], 256
    $region29: #{tpu_custom_call.1} parent=1 // pred_fallthru
      _
    %p52 = scmp.eq.s32.totalorder 0, 0
    // Predicated region
    $region30: #{tpu_custom_call.1} parent=1 // pred_check
      %p53 = pneg %p52
    $region31: #{tpu_custom_call.1} parent=1 // pred_check_branch
      %55 = sbr.rel (%p53) target = $region33
    $region32: #{tpu_custom_call.1} parent=1 // pred_region
      %vm56 = vcmask 261120
      %57 = vst.msk [vmem:[#allocation3] sm:$0xff] %vm56, 0.0
    $region33: #{tpu_custom_call.1} parent=1 // pred_fallthru
      _
    %v58 = vld [vmem:[#allocation8] sm:$0xf]
    %v59 = vld [vmem:[#allocation8 + $0x4] sm:$0xf]
    %v60 = vld [vmem:[#allocation8 + $0x8] sm:$0xf]
    %v61 = vld [vmem:[#allocation8 + $0xc] sm:$0xf]
    %v62 = vld [vmem:[%s2] sm:$0x1]
    %v64 = vlaneseq
    %v65 = vshrl.u32 %v64, 7
    %v66 = vsub.s32 0, %v65
    %v67 = vrot.slane %v62, %v66
    %v68 = vld [vmem:[#allocation3] sm:$0xff]
    %v69 = vld [vmem:[#allocation5] sm:$0xff]
    %v70 = vpack.c.bf16 %v68, %v68
    %v75 = vunpack.c.l.b16 %v58
    %v76 = vunpack.c.l.b16 %v59
    %v77 = vunpack.c.l.b16 %v60
    %v78 = vunpack.c.l.b16 %v61
    %v79 = vpack.c.b16 %v76, %v75
    %v80 = vpack.c.b16 %v78, %v77
    %vm83 = vcmask 261120
    %v85 = vsel %vm83, %v70, 0
    %87 = vmatprep.subr.bf16.mxu0 0
    %88 = vmatpush1.bf16.msra.mxu0 0
    %89 = vmatprep.subr.bf16.mxu0 0
    %90 = vmatpush1.bf16.msra.mxu0 0
    %91 = vmatprep.subr.bf16.mxu0 0
    %92 = vmatpush1.bf16.msra.mxu0 0
    %93 = vmatprep.subr.bf16.mxu0 0
    %94 = vmatpush1.bf16.msra.mxu0 0
    %95 = vmatprep.subr.bf16.mxu0 0
    %96 = vmatpush1.bf16.msra.mxu0 0
    %97 = vmatprep.subr.bf16.mxu0 0
    %98 = vmatpush1.bf16.msra.mxu0 0
    %99 = vmatprep.subr.bf16.mxu0 0
    %100 = vmatpush1.bf16.msra.mxu0 %v80
    %101 = vmatprep.subr.bf16.mxu0 0
    %102 = vmatpush1.bf16.msra.mxu0 %v79
    %103 = vmatprep.subr.bf16.mxu0 0
    %104 = vmatpush2.bf16.msra.mxu0 0
    %105 = vmatprep.subr.bf16.mxu0 0
    %106 = vmatpush2.bf16.msra.mxu0 0
    %107 = vmatprep.subr.bf16.mxu0 0
    %108 = vmatpush2.bf16.msra.mxu0 0
    %109 = vmatprep.subr.bf16.mxu0 0
    %110 = vmatpush2.bf16.msra.mxu0 0
    %111 = vmatprep.subr.bf16.mxu0 0
    %112 = vmatpush2.bf16.msra.mxu0 0
    %113 = vmatprep.subr.bf16.mxu0 0
    %114 = vmatpush2.bf16.msra.mxu0 0
    %115 = vmatprep.subr.bf16.mxu0 0
    %116 = vmatpush2.bf16.msra.mxu0 0
    %117 = vmatprep.subr.bf16.mxu0 0
    %118 = vmatpush2.bf16.msra.mxu0 0
    %119 = vmatprep.mubr.bf16.mxu0 0
    %120 = vmatmul.mubr.bf16.gmra.mxu0 %v85
    %v121 = vpop.f32.mrf.mxu0
    %v122 = vadd.f32 0.0, %v121
    %v123 = vpop.f32.mrf.mxu0
    %v124 = vpop.f32.mrf.mxu0
    %v125 = vpop.f32.mrf.mxu0
    %126 = vdwg.mxu0
    %v127 = vadd.f32 %v69, %v122
    %v128 = vxor.u32 %v127, 2147483648
    %v129 = vmul.f32 %v128, 1.442695
    %v130 = vpow.pop %v129
    %v131 = vadd.f32 %v130, 1.0
    %v132 = vrcp.pop %v131
    %v133 = vmul.f32 1.0, %v132
    %134 = vrot.lane.b32.xlu0 %v67, 64
    %v135 = vpop.permute.xlu0 %134
    %v137 = vadd.f32 %v122, %v135
    %139 = vrot.lane.b32.xlu0 %v137, 64
    %v140 = vpop.permute.xlu0 %139
    %v142 = vmul.f32 %v133, %v140
    %144 = vrot.lane.b32.xlu0 %v142, 64
    %v145 = vpop.permute.xlu0 %144
    %v147 = vadd.f32 %v69, %v145
    %v148 = vtanh.pop %v147
    %v149 = vsub.f32 1.0, %v133
    %151 = vrot.lane.b32.xlu0 %v148, 96
    %v152 = vpop.permute.xlu0 %151
    %v154 = vmul.f32 %v149, %v152
    %156 = vrot.lane.b32.xlu0 %v68, 32
    %v157 = vpop.permute.xlu0 %156
    %v159 = vmul.f32 %v133, %v157
    %v160 = vadd.f32 %v154, %v159
    %162 = vrot.lane.b32.xlu0 %v160, 96
    %v163 = vpop.permute.xlu0 %162
    %165 = vst.msk [vmem:[#allocation2] sm:$0xff] %vm83, %v163
    %s166 = scalar_lea.vmem [#allocation5], 8
    %v167 = vld [vmem:[%s166] sm:$0xff]
    %v168 = vpack.c.bf16 %v160, %v160
    %170 = vrot.lane.b32.xlu0 %v168, 96
    %v171 = vpop.permute.xlu0 %170
    %v173 = vsel %vm83, %v171, 0
    %175 = vmatprep.subr.bf16.mxu0 0
    %176 = vmatpush1.bf16.msra.mxu0 0
    %177 = vmatprep.subr.bf16.mxu0 0
    %178 = vmatpush1.bf16.msra.mxu0 0
    %179 = vmatprep.subr.bf16.mxu0 0
    %180 = vmatpush1.bf16.msra.mxu0 0
    %181 = vmatprep.subr.bf16.mxu0 0
    %182 = vmatpush1.bf16.msra.mxu0 0
    %183 = vmatprep.subr.bf16.mxu0 0
    %184 = vmatpush1.bf16.msra.mxu0 0
    %185 = vmatprep.subr.bf16.mxu0 0
    %186 = vmatpush1.bf16.msra.mxu0 0
    %187 = vmatprep.subr.bf16.mxu0 0
    %188 = vmatpush1.bf16.msra.mxu0 %v80
    %189 = vmatprep.subr.bf16.mxu0 0
    %190 = vmatpush1.bf16.msra.mxu0 %v79
    %191 = vmatprep.subr.bf16.mxu0 0
    %192 = vmatpush2.bf16.msra.mxu0 0
    %193 = vmatprep.subr.bf16.mxu0 0
    %194 = vmatpush2.bf16.msra.mxu0 0
    %195 = vmatprep.subr.bf16.mxu0 0
    %196 = vmatpush2.bf16.msra.mxu0 0
    %197 = vmatprep.subr.bf16.mxu0 0
    %198 = vmatpush2.bf16.msra.mxu0 0
    %199 = vmatprep.subr.bf16.mxu0 0
    %200 = vmatpush2.bf16.msra.mxu0 0
    %201 = vmatprep.subr.bf16.mxu0 0
    %202 = vmatpush2.bf16.msra.mxu0 0
    %203 = vmatprep.subr.bf16.mxu0 0
    %204 = vmatpush2.bf16.msra.mxu0 0
    %205 = vmatprep.subr.bf16.mxu0 0
    %206 = vmatpush2.bf16.msra.mxu0 0
    %207 = vmatprep.mubr.bf16.mxu0 0
    %208 = vmatmul.mubr.bf16.gmra.mxu0 %v173
    %v209 = vpop.f32.mrf.mxu0
    %v210 = vadd.f32 0.0, %v209
    %v211 = vpop.f32.mrf.mxu0
    %v212 = vpop.f32.mrf.mxu0
    %v213 = vpop.f32.mrf.mxu0
    %214 = vdwg.mxu0
    %v215 = vadd.f32 %v167, %v210
    %v216 = vxor.u32 %v215, 2147483648
    %v217 = vmul.f32 %v216, 1.442695
    %v218 = vpow.pop %v217
    %v219 = vadd.f32 %v218, 1.0
    %v220 = vrcp.pop %v219
    %v221 = vmul.f32 1.0, %v220
    %v222 = vadd.f32 %v210, %v135
    %224 = vrot.lane.b32.xlu0 %v222, 64
    %v225 = vpop.permute.xlu0 %224
    %v227 = vmul.f32 %v221, %v225
    %229 = vrot.lane.b32.xlu0 %v227, 64
    %v230 = vpop.permute.xlu0 %229
    %v232 = vadd.f32 %v167, %v230
    %v233 = vtanh.pop %v232
    %v234 = vsub.f32 1.0, %v221
    %236 = vrot.lane.b32.xlu0 %v233, 96
    %v237 = vpop.permute.xlu0 %236
    %v239 = vmul.f32 %v234, %v237
    %v240 = vmul.f32 %v221, %v160
    %v241 = vadd.f32 %v239, %v240
    %243 = vrot.lane.b32.xlu0 %v241, 96
    %v244 = vpop.permute.xlu0 %243
    %s246 = scalar_lea.vmem [#allocation2], 8
    %247 = vst.msk [vmem:[%s246] sm:$0xff] %vm83, %v244
    %s248 = scalar_lea.vmem [#allocation5], 16
    %v249 = vld [vmem:[%s248] sm:$0xff]
    %v250 = vpack.c.bf16 %v241, %v241
    %252 = vrot.lane.b32.xlu0 %v250, 96
    %v253 = vpop.permute.xlu0 %252
    %v255 = vsel %vm83, %v253, 0
    %257 = vmatprep.subr.bf16.mxu0 0
    %258 = vmatpush1.bf16.msra.mxu0 0
    %259 = vmatprep.subr.bf16.mxu0 0
    %260 = vmatpush1.bf16.msra.mxu0 0
    %261 = vmatprep.subr.bf16.mxu0 0
    %262 = vmatpush1.bf16.msra.mxu0 0
    %263 = vmatprep.subr.bf16.mxu0 0
    %264 = vmatpush1.bf16.msra.mxu0 0
    %265 = vmatprep.subr.bf16.mxu0 0
    %266 = vmatpush1.bf16.msra.mxu0 0
    %267 = vmatprep.subr.bf16.mxu0 0
    %268 = vmatpush1.bf16.msra.mxu0 0
    %269 = vmatprep.subr.bf16.mxu0 0
    %270 = vmatpush1.bf16.msra.mxu0 %v80
    %271 = vmatprep.subr.bf16.mxu0 0
    %272 = vmatpush1.bf16.msra.mxu0 %v79
    %273 = vmatprep.subr.bf16.mxu0 0
    %274 = vmatpush2.bf16.msra.mxu0 0
    %275 = vmatprep.subr.bf16.mxu0 0
    %276 = vmatpush2.bf16.msra.mxu0 0
    %277 = vmatprep.subr.bf16.mxu0 0
    %278 = vmatpush2.bf16.msra.mxu0 0
    %279 = vmatprep.subr.bf16.mxu0 0
    %280 = vmatpush2.bf16.msra.mxu0 0
    %281 = vmatprep.subr.bf16.mxu0 0
    %282 = vmatpush2.bf16.msra.mxu0 0
    %283 = vmatprep.subr.bf16.mxu0 0
    %284 = vmatpush2.bf16.msra.mxu0 0
    %285 = vmatprep.subr.bf16.mxu0 0
    %286 = vmatpush2.bf16.msra.mxu0 0
    %287 = vmatprep.subr.bf16.mxu0 0
    %288 = vmatpush2.bf16.msra.mxu0 0
    %289 = vmatprep.mubr.bf16.mxu0 0
    %290 = vmatmul.mubr.bf16.gmra.mxu0 %v255
    %v291 = vpop.f32.mrf.mxu0
    %v292 = vadd.f32 0.0, %v291
    %v293 = vpop.f32.mrf.mxu0
    %v294 = vpop.f32.mrf.mxu0
    %v295 = vpop.f32.mrf.mxu0
    %296 = vdwg.mxu0
    %v297 = vadd.f32 %v249, %v292
    %v298 = vxor.u32 %v297, 2147483648
    %v299 = vmul.f32 %v298, 1.442695
    %v300 = vpow.pop %v299
    %v301 = vadd.f32 %v300, 1.0
    %v302 = vrcp.pop %v301
    %v303 = vmul.f32 1.0, %v302
    %v304 = vadd.f32 %v292, %v135
    %306 = vrot.lane.b32.xlu0 %v304, 64
    %v307 = vpop.permute.xlu0 %306
    %v309 = vmul.f32 %v303, %v307
    %311 = vrot.lane.b32.xlu0 %v309, 64
    %v312 = vpop.permute.xlu0 %311
    %v314 = vadd.f32 %v249, %v312
    %v315 = vtanh.pop %v314
    %v316 = vsub.f32 1.0, %v303
    %318 = vrot.lane.b32.xlu0 %v315, 96
    %v319 = vpop.permute.xlu0 %318
    %v321 = vmul.f32 %v316, %v319
    %v322 = vmul.f32 %v303, %v241
    %v323 = vadd.f32 %v321, %v322
    %325 = vrot.lane.b32.xlu0 %v323, 96
    %v326 = vpop.permute.xlu0 %325
    %s328 = scalar_lea.vmem [#allocation2], 16
    %329 = vst.msk [vmem:[%s328] sm:$0xff] %vm83, %v326
    %s330 = scalar_lea.vmem [#allocation5], 24
    %v331 = vld [vmem:[%s330] sm:$0xff]
    %v332 = vpack.c.bf16 %v323, %v323
    %334 = vrot.lane.b32.xlu0 %v332, 96
    %v335 = vpop.permute.xlu0 %334
    %v337 = vsel %vm83, %v335, 0
    %339 = vmatprep.subr.bf16.mxu0 0
    %340 = vmatpush1.bf16.msra.mxu0 0
    %341 = vmatprep.subr.bf16.mxu0 0
    %342 = vmatpush1.bf16.msra.mxu0 0
    %343 = vmatprep.subr.bf16.mxu0 0
    %344 = vmatpush1.bf16.msra.mxu0 0
    %345 = vmatprep.subr.bf16.mxu0 0
    %346 = vmatpush1.bf16.msra.mxu0 0
    %347 = vmatprep.subr.bf16.mxu0 0
    %348 = vmatpush1.bf16.msra.mxu0 0
    %349 = vmatprep.subr.bf16.mxu0 0
    %350 = vmatpush1.bf16.msra.mxu0 0
    %351 = vmatprep.subr.bf16.mxu0 0
    %352 = vmatpush1.bf16.msra.mxu0 %v80
    %353 = vmatprep.subr.bf16.mxu0 0
    %354 = vmatpush1.bf16.msra.mxu0 %v79
    %355 = vmatprep.subr.bf16.mxu0 0
    %356 = vmatpush2.bf16.msra.mxu0 0
    %357 = vmatprep.subr.bf16.mxu0 0
    %358 = vmatpush2.bf16.msra.mxu0 0
    %359 = vmatprep.subr.bf16.mxu0 0
    %360 = vmatpush2.bf16.msra.mxu0 0
    %361 = vmatprep.subr.bf16.mxu0 0
    %362 = vmatpush2.bf16.msra.mxu0 0
    %363 = vmatprep.subr.bf16.mxu0 0
    %364 = vmatpush2.bf16.msra.mxu0 0
    %365 = vmatprep.subr.bf16.mxu0 0
    %366 = vmatpush2.bf16.msra.mxu0 0
    %367 = vmatprep.subr.bf16.mxu0 0
    %368 = vmatpush2.bf16.msra.mxu0 0
    %369 = vmatprep.subr.bf16.mxu0 0
    %370 = vmatpush2.bf16.msra.mxu0 0
    %371 = vmatprep.mubr.bf16.mxu0 0
    %372 = vmatmul.mubr.bf16.gmra.mxu0 %v337
    %v373 = vpop.f32.mrf.mxu0
    %v374 = vadd.f32 0.0, %v373
    %v375 = vpop.f32.mrf.mxu0
    %v376 = vpop.f32.mrf.mxu0
    %v377 = vpop.f32.mrf.mxu0
    %378 = vdwg.mxu0
    %v379 = vadd.f32 %v331, %v374
    %v380 = vxor.u32 %v379, 2147483648
    %v381 = vmul.f32 %v380, 1.442695
    %v382 = vpow.pop %v381
    %v383 = vadd.f32 %v382, 1.0
    %v384 = vrcp.pop %v383
    %v385 = vmul.f32 1.0, %v384
    %v386 = vadd.f32 %v374, %v135
    %388 = vrot.lane.b32.xlu0 %v386, 64
    %v389 = vpop.permute.xlu0 %388
    %v391 = vmul.f32 %v385, %v389
    %393 = vrot.lane.b32.xlu0 %v391, 64
    %v394 = vpop.permute.xlu0 %393
    %v396 = vadd.f32 %v331, %v394
    %v397 = vtanh.pop %v396
    %v398 = vsub.f32 1.0, %v385
    %400 = vrot.lane.b32.xlu0 %v397, 96
    %v401 = vpop.permute.xlu0 %400
    %v403 = vmul.f32 %v398, %v401
    %v404 = vmul.f32 %v385, %v323
    %v405 = vadd.f32 %v403, %v404
    %407 = vrot.lane.b32.xlu0 %v405, 96
    %v408 = vpop.permute.xlu0 %407
    %s410 = scalar_lea.vmem [#allocation2], 24
    %411 = vst.msk [vmem:[%s410] sm:$0xff] %vm83, %v408
    %s412 = scalar_lea.vmem [#allocation5], 32
    %v413 = vld [vmem:[%s412] sm:$0xff]
    %v414 = vpack.c.bf16 %v405, %v405
    %416 = vrot.lane.b32.xlu0 %v414, 96
    %v417 = vpop.permute.xlu0 %416
    %v419 = vsel %vm83, %v417, 0
    %421 = vmatprep.subr.bf16.mxu0 0
    %422 = vmatpush1.bf16.msra.mxu0 0
    %423 = vmatprep.subr.bf16.mxu0 0
    %424 = vmatpush1.bf16.msra.mxu0 0
    %425 = vmatprep.subr.bf16.mxu0 0
    %426 = vmatpush1.bf16.msra.mxu0 0
    %427 = vmatprep.subr.bf16.mxu0 0
    %428 = vmatpush1.bf16.msra.mxu0 0
    %429 = vmatprep.subr.bf16.mxu0 0
    %430 = vmatpush1.bf16.msra.mxu0 0
    %431 = vmatprep.subr.bf16.mxu0 0
    %432 = vmatpush1.bf16.msra.mxu0 0
    %433 = vmatprep.subr.bf16.mxu0 0
    %434 = vmatpush1.bf16.msra.mxu0 %v80
    %435 = vmatprep.subr.bf16.mxu0 0
    %436 = vmatpush1.bf16.msra.mxu0 %v79
    %437 = vmatprep.subr.bf16.mxu0 0
    %438 = vmatpush2.bf16.msra.mxu0 0
    %439 = vmatprep.subr.bf16.mxu0 0
    %440 = vmatpush2.bf16.msra.mxu0 0
    %441 = vmatprep.subr.bf16.mxu0 0
    %442 = vmatpush2.bf16.msra.mxu0 0
    %443 = vmatprep.subr.bf16.mxu0 0
    %444 = vmatpush2.bf16.msra.mxu0 0
    %445 = vmatprep.subr.bf16.mxu0 0
    %446 = vmatpush2.bf16.msra.mxu0 0
    %447 = vmatprep.subr.bf16.mxu0 0
    %448 = vmatpush2.bf16.msra.mxu0 0
    %449 = vmatprep.subr.bf16.mxu0 0
    %450 = vmatpush2.bf16.msra.mxu0 0
    %451 = vmatprep.subr.bf16.mxu0 0
    %452 = vmatpush2.bf16.msra.mxu0 0
    %453 = vmatprep.mubr.bf16.mxu0 0
    %454 = vmatmul.mubr.bf16.gmra.mxu0 %v419
    %v455 = vpop.f32.mrf.mxu0
    %v456 = vadd.f32 0.0, %v455
    %v457 = vpop.f32.mrf.mxu0
    %v458 = vpop.f32.mrf.mxu0
    %v459 = vpop.f32.mrf.mxu0
    %460 = vdwg.mxu0
    %v461 = vadd.f32 %v413, %v456
    %v462 = vxor.u32 %v461, 2147483648
    %v463 = vmul.f32 %v462, 1.442695
    %v464 = vpow.pop %v463
    %v465 = vadd.f32 %v464, 1.0
    %v466 = vrcp.pop %v465
    %v467 = vmul.f32 1.0, %v466
    %v468 = vadd.f32 %v456, %v135
    %470 = vrot.lane.b32.xlu0 %v468, 64
    %v471 = vpop.permute.xlu0 %470
    %v473 = vmul.f32 %v467, %v471
    %475 = vrot.lane.b32.xlu0 %v473, 64
    %v476 = vpop.permute.xlu0 %475
    %v478 = vadd.f32 %v413, %v476
    %v479 = vtanh.pop %v478
    %v480 = vsub.f32 1.0, %v467
    %482 = vrot.lane.b32.xlu0 %v479, 96
    %v483 = vpop.permute.xlu0 %482
    %v485 = vmul.f32 %v480, %v483
    %v486 = vmul.f32 %v467, %v405
    %v487 = vadd.f32 %v485, %v486
    %489 = vrot.lane.b32.xlu0 %v487, 96
    %v490 = vpop.permute.xlu0 %489
    %s492 = scalar_lea.vmem [#allocation2], 32
    %493 = vst.msk [vmem:[%s492] sm:$0xff] %vm83, %v490
    %s494 = scalar_lea.vmem [#allocation5], 40
    %v495 = vld [vmem:[%s494] sm:$0xff]
    %v496 = vpack.c.bf16 %v487, %v487
    %498 = vrot.lane.b32.xlu0 %v496, 96
    %v499 = vpop.permute.xlu0 %498
    %v501 = vsel %vm83, %v499, 0
    %503 = vmatprep.subr.bf16.mxu0 0
    %504 = vmatpush1.bf16.msra.mxu0 0
    %505 = vmatprep.subr.bf16.mxu0 0
    %506 = vmatpush1.bf16.msra.mxu0 0
    %507 = vmatprep.subr.bf16.mxu0 0
    %508 = vmatpush1.bf16.msra.mxu0 0
    %509 = vmatprep.subr.bf16.mxu0 0
    %510 = vmatpush1.bf16.msra.mxu0 0
    %511 = vmatprep.subr.bf16.mxu0 0
    %512 = vmatpush1.bf16.msra.mxu0 0
    %513 = vmatprep.subr.bf16.mxu0 0
    %514 = vmatpush1.bf16.msra.mxu0 0
    %515 = vmatprep.subr.bf16.mxu0 0
    %516 = vmatpush1.bf16.msra.mxu0 %v80
    %517 = vmatprep.subr.bf16.mxu0 0
    %518 = vmatpush1.bf16.msra.mxu0 %v79
    %519 = vmatprep.subr.bf16.mxu0 0
    %520 = vmatpush2.bf16.msra.mxu0 0
    %521 = vmatprep.subr.bf16.mxu0 0
    %522 = vmatpush2.bf16.msra.mxu0 0
    %523 = vmatprep.subr.bf16.mxu0 0
    %524 = vmatpush2.bf16.msra.mxu0 0
    %525 = vmatprep.subr.bf16.mxu0 0
    %526 = vmatpush2.bf16.msra.mxu0 0
    %527 = vmatprep.subr.bf16.mxu0 0
    %528 = vmatpush2.bf16.msra.mxu0 0
    %529 = vmatprep.subr.bf16.mxu0 0
    %530 = vmatpush2.bf16.msra.mxu0 0
    %531 = vmatprep.subr.bf16.mxu0 0
    %532 = vmatpush2.bf16.msra.mxu0 0
    %533 = vmatprep.subr.bf16.mxu0 0
    %534 = vmatpush2.bf16.msra.mxu0 0
    %535 = vmatprep.mubr.bf16.mxu0 0
    %536 = vmatmul.mubr.bf16.gmra.mxu0 %v501
    %v537 = vpop.f32.mrf.mxu0
    %v538 = vadd.f32 0.0, %v537
    %v539 = vpop.f32.mrf.mxu0
    %v540 = vpop.f32.mrf.mxu0
    %v541 = vpop.f32.mrf.mxu0
    %542 = vdwg.mxu0
    %v543 = vadd.f32 %v495, %v538
    %v544 = vxor.u32 %v543, 2147483648
    %v545 = vmul.f32 %v544, 1.442695
    %v546 = vpow.pop %v545
    %v547 = vadd.f32 %v546, 1.0
    %v548 = vrcp.pop %v547
    %v549 = vmul.f32 1.0, %v548
    %v550 = vadd.f32 %v538, %v135
    %552 = vrot.lane.b32.xlu0 %v550, 64
    %v553 = vpop.permute.xlu0 %552
    %v555 = vmul.f32 %v549, %v553
    %557 = vrot.lane.b32.xlu0 %v555, 64
    %v558 = vpop.permute.xlu0 %557
    %v560 = vadd.f32 %v495, %v558
    %v561 = vtanh.pop %v560
    %v562 = vsub.f32 1.0, %v549
    %564 = vrot.lane.b32.xlu0 %v561, 96
    %v565 = vpop.permute.xlu0 %564
    %v567 = vmul.f32 %v562, %v565
    %v568 = vmul.f32 %v549, %v487
    %v569 = vadd.f32 %v567, %v568
    %571 = vrot.lane.b32.xlu0 %v569, 96
    %v572 = vpop.permute.xlu0 %571
    %s574 = scalar_lea.vmem [#allocation2], 40
    %575 = vst.msk [vmem:[%s574] sm:$0xff] %vm83, %v572
    %s576 = scalar_lea.vmem [#allocation5], 48
    %v577 = vld [vmem:[%s576] sm:$0xff]
    %v578 = vpack.c.bf16 %v569, %v569
    %580 = vrot.lane.b32.xlu0 %v578, 96
    %v581 = vpop.permute.xlu0 %580
    %v583 = vsel %vm83, %v581, 0
    %585 = vmatprep.subr.bf16.mxu0 0
    %586 = vmatpush1.bf16.msra.mxu0 0
    %587 = vmatprep.subr.bf16.mxu0 0
    %588 = vmatpush1.bf16.msra.mxu0 0
    %589 = vmatprep.subr.bf16.mxu0 0
    %590 = vmatpush1.bf16.msra.mxu0 0
    %591 = vmatprep.subr.bf16.mxu0 0
    %592 = vmatpush1.bf16.msra.mxu0 0
    %593 = vmatprep.subr.bf16.mxu0 0
    %594 = vmatpush1.bf16.msra.mxu0 0
    %595 = vmatprep.subr.bf16.mxu0 0
    %596 = vmatpush1.bf16.msra.mxu0 0
    %597 = vmatprep.subr.bf16.mxu0 0
    %598 = vmatpush1.bf16.msra.mxu0 %v80
    %599 = vmatprep.subr.bf16.mxu0 0
    %600 = vmatpush1.bf16.msra.mxu0 %v79
    %601 = vmatprep.subr.bf16.mxu0 0
    %602 = vmatpush2.bf16.msra.mxu0 0
    %603 = vmatprep.subr.bf16.mxu0 0
    %604 = vmatpush2.bf16.msra.mxu0 0
    %605 = vmatprep.subr.bf16.mxu0 0
    %606 = vmatpush2.bf16.msra.mxu0 0
    %607 = vmatprep.subr.bf16.mxu0 0
    %608 = vmatpush2.bf16.msra.mxu0 0
    %609 = vmatprep.subr.bf16.mxu0 0
    %610 = vmatpush2.bf16.msra.mxu0 0
    %611 = vmatprep.subr.bf16.mxu0 0
    %612 = vmatpush2.bf16.msra.mxu0 0
    %613 = vmatprep.subr.bf16.mxu0 0
    %614 = vmatpush2.bf16.msra.mxu0 0
    %615 = vmatprep.subr.bf16.mxu0 0
    %616 = vmatpush2.bf16.msra.mxu0 0
    %617 = vmatprep.mubr.bf16.mxu0 0
    %618 = vmatmul.mubr.bf16.gmra.mxu0 %v583
    %v619 = vpop.f32.mrf.mxu0
    %v620 = vadd.f32 0.0, %v619
    %v621 = vpop.f32.mrf.mxu0
    %v622 = vpop.f32.mrf.mxu0
    %v623 = vpop.f32.mrf.mxu0
    %624 = vdwg.mxu0
    %v625 = vadd.f32 %v577, %v620
    %v626 = vxor.u32 %v625, 2147483648
    %v627 = vmul.f32 %v626, 1.442695
    %v628 = vpow.pop %v627
    %v629 = vadd.f32 %v628, 1.0
    %v630 = vrcp.pop %v629
    %v631 = vmul.f32 1.0, %v630
    %v632 = vadd.f32 %v620, %v135
    %634 = vrot.lane.b32.xlu0 %v632, 64
    %v635 = vpop.permute.xlu0 %634
    %v637 = vmul.f32 %v631, %v635
    %639 = vrot.lane.b32.xlu0 %v637, 64
    %v640 = vpop.permute.xlu0 %639
    %v642 = vadd.f32 %v577, %v640
    %v643 = vtanh.pop %v642
    %v644 = vsub.f32 1.0, %v631
    %646 = vrot.lane.b32.xlu0 %v643, 96
    %v647 = vpop.permute.xlu0 %646
    %v649 = vmul.f32 %v644, %v647
    %v650 = vmul.f32 %v631, %v569
    %v651 = vadd.f32 %v649, %v650
    %653 = vrot.lane.b32.xlu0 %v651, 96
    %v654 = vpop.permute.xlu0 %653
    %s656 = scalar_lea.vmem [#allocation2], 48
    %657 = vst.msk [vmem:[%s656] sm:$0xff] %vm83, %v654
    %s658 = scalar_lea.vmem [#allocation5], 56
    %v659 = vld [vmem:[%s658] sm:$0xff]
    %v660 = vpack.c.bf16 %v651, %v651
    %662 = vrot.lane.b32.xlu0 %v660, 96
    %v663 = vpop.permute.xlu0 %662
    %v665 = vsel %vm83, %v663, 0
    %667 = vmatprep.subr.bf16.mxu0 0
    %668 = vmatpush1.bf16.msra.mxu0 0
    %669 = vmatprep.subr.bf16.mxu0 0
    %670 = vmatpush1.bf16.msra.mxu0 0
    %671 = vmatprep.subr.bf16.mxu0 0
    %672 = vmatpush1.bf16.msra.mxu0 0
    %673 = vmatprep.subr.bf16.mxu0 0
    %674 = vmatpush1.bf16.msra.mxu0 0
    %675 = vmatprep.subr.bf16.mxu0 0
    %676 = vmatpush1.bf16.msra.mxu0 0
    %677 = vmatprep.subr.bf16.mxu0 0
    %678 = vmatpush1.bf16.msra.mxu0 0
    %679 = vmatprep.subr.bf16.mxu0 0
    %680 = vmatpush1.bf16.msra.mxu0 %v80
    %681 = vmatprep.subr.bf16.mxu0 0
    %682 = vmatpush1.bf16.msra.mxu0 %v79
    %683 = vmatprep.subr.bf16.mxu0 0
    %684 = vmatpush2.bf16.msra.mxu0 0
    %685 = vmatprep.subr.bf16.mxu0 0
    %686 = vmatpush2.bf16.msra.mxu0 0
    %687 = vmatprep.subr.bf16.mxu0 0
    %688 = vmatpush2.bf16.msra.mxu0 0
    %689 = vmatprep.subr.bf16.mxu0 0
    %690 = vmatpush2.bf16.msra.mxu0 0
    %691 = vmatprep.subr.bf16.mxu0 0
    %692 = vmatpush2.bf16.msra.mxu0 0
    %693 = vmatprep.subr.bf16.mxu0 0
    %694 = vmatpush2.bf16.msra.mxu0 0
    %695 = vmatprep.subr.bf16.mxu0 0
    %696 = vmatpush2.bf16.msra.mxu0 0
    %697 = vmatprep.subr.bf16.mxu0 0
    %698 = vmatpush2.bf16.msra.mxu0 0
    %699 = vmatprep.mubr.bf16.mxu0 0
    %700 = vmatmul.mubr.bf16.gmra.mxu0 %v665
    %v701 = vpop.f32.mrf.mxu0
    %v702 = vadd.f32 0.0, %v701
    %v703 = vpop.f32.mrf.mxu0
    %v704 = vpop.f32.mrf.mxu0
    %v705 = vpop.f32.mrf.mxu0
    %706 = vdwg.mxu0
    %v707 = vadd.f32 %v659, %v702
    %v708 = vxor.u32 %v707, 2147483648
    %v709 = vmul.f32 %v708, 1.442695
    %v710 = vpow.pop %v709
    %v711 = vadd.f32 %v710, 1.0
    %v712 = vrcp.pop %v711
    %v713 = vmul.f32 1.0, %v712
    %v714 = vadd.f32 %v702, %v135
    %716 = vrot.lane.b32.xlu0 %v714, 64
    %v717 = vpop.permute.xlu0 %716
    %v719 = vmul.f32 %v713, %v717
    %721 = vrot.lane.b32.xlu0 %v719, 64
    %v722 = vpop.permute.xlu0 %721
    %v724 = vadd.f32 %v659, %v722
    %v725 = vtanh.pop %v724
    %v726 = vsub.f32 1.0, %v713
    %728 = vrot.lane.b32.xlu0 %v725, 96
    %v729 = vpop.permute.xlu0 %728
    %v731 = vmul.f32 %v726, %v729
    %v732 = vmul.f32 %v713, %v651
    %v733 = vadd.f32 %v731, %v732
    %735 = vrot.lane.b32.xlu0 %v733, 96
    %v736 = vpop.permute.xlu0 %735
    %s738 = scalar_lea.vmem [#allocation2], 56
    %739 = vst.msk [vmem:[%s738] sm:$0xff] %vm83, %v736
    %740 = vst.msk [vmem:[#allocation3] sm:$0xff] %vm83, %v736
    %v741 = vld [vmem:[%s3] sm:$0x1]
    %v742 = vld [vmem:[#allocation2] sm:$0xff]
    %v743 = vld [vmem:[#allocation2 + $0x8] sm:$0xff]
    %v744 = vld [vmem:[#allocation2 + $0x10] sm:$0xff]
    %v745 = vld [vmem:[#allocation2 + $0x18] sm:$0xff]
    %v746 = vld [vmem:[#allocation2 + $0x20] sm:$0xff]
    %v747 = vld [vmem:[#allocation2 + $0x28] sm:$0xff]
    %v748 = vld [vmem:[#allocation2 + $0x30] sm:$0xff]
    %v749 = vld [vmem:[#allocation2 + $0x38] sm:$0xff]
    %v750 = vpack.c.bf16 %v743, %v742
    %v751 = vpack.c.bf16 %v745, %v744
    %v752 = vpack.c.bf16 %v747, %v746
    %v753 = vpack.c.bf16 %v749, %v748
    %v754 = vld [vmem:[#allocation4] sm:$0x1]
    %756 = vset.pattern.permute.xlu0 0
    %757 = vperm.xlu0 %756, %v754
    %v758 = vpop.permute.xlu0 %757
    %v760 = vlaneseq
    %v761 = vshrl.u32 %v760, 7
    %v762 = vsub.s32 0, %v761
    %v763 = vrot.slane %v758, %v762
    %v765 = vsel %vm83, %v741, 0
    %v768 = vsel %vm83, %v750, 0
    %v771 = vsel %vm83, %v751, 0
    %v774 = vsel %vm83, %v752, 0
    %v777 = vsel %vm83, %v753, 0
    %779 = vmatprep.subr.bf16.mxu0 0
    %780 = vmatpush1.bf16.xpose.msra.mxu0 0
    %781 = vmatprep.subr.bf16.mxu0 0
    %782 = vmatpush1.bf16.xpose.msra.mxu0 0
    %783 = vmatprep.subr.bf16.mxu0 0
    %784 = vmatpush1.bf16.xpose.msra.mxu0 0
    %785 = vmatprep.subr.bf16.mxu0 0
    %786 = vmatpush1.bf16.xpose.msra.mxu0 0
    %787 = vmatprep.subr.bf16.mxu0 0
    %788 = vmatpush1.bf16.xpose.msra.mxu0 %v777
    %789 = vmatprep.subr.bf16.mxu0 0
    %790 = vmatpush1.bf16.xpose.msra.mxu0 %v774
    %791 = vmatprep.subr.bf16.mxu0 0
    %792 = vmatpush1.bf16.xpose.msra.mxu0 %v771
    %793 = vmatprep.subr.bf16.mxu0 0
    %794 = vmatpush1.bf16.xpose.msra.mxu0 %v768
    %795 = vmatprep.subr.bf16.mxu0 0
    %796 = vmatpush2.bf16.xpose.msra.mxu0 0
    %797 = vmatprep.subr.bf16.mxu0 0
    %798 = vmatpush2.bf16.xpose.msra.mxu0 0
    %799 = vmatprep.subr.bf16.mxu0 0
    %800 = vmatpush2.bf16.xpose.msra.mxu0 0
    %801 = vmatprep.subr.bf16.mxu0 0
    %802 = vmatpush2.bf16.xpose.msra.mxu0 0
    %803 = vmatprep.subr.bf16.mxu0 0
    %804 = vmatpush2.bf16.xpose.msra.mxu0 0
    %805 = vmatprep.subr.bf16.mxu0 0
    %806 = vmatpush2.bf16.xpose.msra.mxu0 0
    %807 = vmatprep.subr.bf16.mxu0 0
    %808 = vmatpush2.bf16.xpose.msra.mxu0 0
    %809 = vmatprep.subr.bf16.mxu0 0
    %810 = vmatpush2.bf16.xpose.msra.mxu0 0
    %811 = vmatprep.mubr.bf16.mxu0 0
    %812 = vmatmul.mubr.bf16.gmra.mxu0 %v765
    %v813 = vpop.f32.mrf.mxu0
    %v814 = vadd.f32 %v763, %v813
    %v815 = vpop.f32.mrf.mxu0
    %v816 = vpop.f32.mrf.mxu0
    %v817 = vpop.f32.mrf.mxu0
    %818 = vdwg.mxu0
    %v819 = vtanh.pop %v814
    %vm820 = vcmask 516096
    %821 = vst.msk [vmem:[#allocation10] sm:$0x1] %vm820, %v819
    // Predicated region
    $region34: #{tpu_custom_call.1} parent=1 // pred_check
      _
    $region35: #{tpu_custom_call.1} parent=1 // pred_check_branch
      %823 = sbr.rel (0) target = $region37
    $region36: #{tpu_custom_call.1} parent=1 // pred_region
      %s825 = ssub.s32 16, 16
      %826 = vsyncadd [#allocation7], %s825
      %s828 = sshll.u32 [#allocation10], 4
      %s829 = int_to_ptr.vmem [resolvable:$true] %s828
      %831 = dma.vmem_to_hbm [thread:$0]  %s829, 16, %s5, [#allocation7]
    $region37: #{tpu_custom_call.1} parent=1 // pred_fallthru
      _
    // Predicated region
    $region38: #{tpu_custom_call.1} parent=1 // pred_check
      _
    $region39: #{tpu_custom_call.1} parent=1 // pred_check_branch
      %833 = sbr.rel (0) target = $region41
    $region40: #{tpu_custom_call.1} parent=1 // pred_region
      %834 = dma.done [#allocation7], 16
    $region41: #{tpu_custom_call.1} parent=1 // pred_fallthru
      _
    %835 = vsyncpa [#allocation6], 1
    %836 = vsyncpa [#allocation9], 1
    %837 = vsyncpa [#allocation7], 1

</llo_original>
